<compile_context>
chip_gen: v6e
topology: v6e:2x2x1
jax: 0.10.0
libtpu: 0.0.40
codegen_flags: <defaults>
</compile_context>

<pallas_src>
import jax
import jax.numpy as jnp
from jax.experimental import pallas as pl
from jax.experimental.pallas import tpu as pltpu


LANE = 128                  # pad class dim to full lane width for dense stores
SUBLANE = 8                 # row tiles must be a multiple of the sublane count
DEFAULT_BLOCK_ROWS = 512    # ~85% of HBM roofline on v6e; fits default scoped VMEM on v5e/v6e/v7x
MIN_ROWS_FOR_PALLAS = 256   # below this jnp.dot + XLA fusion wins


def _round_up(n, m):
    return ((n + m - 1) // m) * m


def _linear_kernel(x_ref, w_ref, b_ref, o_ref):
    # One row tile of x against the full (lane-padded) weight:
    # single MXU matmul with f32 accumulation, bias add on the VPU, cast back.
    acc = jnp.dot(x_ref[...], w_ref[...], preferred_element_type=jnp.float32)
    o_ref[...] = (acc + b_ref[...].astype(jnp.float32)).astype(o_ref.dtype)


def prepare_pooler_params(weight, bias):
    """One-time parameter prep (hoisted out of the per-call path).

    weight: [C, H] (PyTorch nn.Linear layout), bias: [C]
    Returns w_pad: [H, C_pad], b_pad: [1, C_pad] with C_pad a multiple of 128.
    """
    C, H = weight.shape
    c_pad = _round_up(max(C, 1), LANE)
    w_pad = jnp.zeros((H, c_pad), dtype=weight.dtype).at[:, :C].set(weight.T)
    b_pad = jnp.zeros((1, c_pad), dtype=bias.dtype).at[0, :C].set(bias)
    return w_pad, b_pad, C


def _pallas_linear(x2d, w_pad, b_pad, out_dtype, block_rows):
    rows, H = x2d.shape
    c_pad = w_pad.shape[1]

    # Row tile: biggest of (block_rows, all rows rounded to sublane), sublane aligned.
    tm = _round_up(min(block_rows, _round_up(rows, SUBLANE)), SUBLANE)
    rows_pad = _round_up(rows, tm)
    if rows_pad != rows:
        x2d = jnp.pad(x2d, ((0, rows_pad - rows), (0, 0)))

    xb = x2d.dtype.itemsize
    wb = w_pad.dtype.itemsize
    ob = jnp.dtype(out_dtype).itemsize

    cost = pl.CostEstimate(
        flops=2 * rows_pad * H * c_pad,
        transcendentals=0,
        bytes_accessed=(rows_pad * H * xb            # stream x
                        + H * c_pad * wb + c_pad * wb  # weight + bias (resident)
                        + rows_pad * c_pad * ob),      # write logits
    )

    # Per-step VMEM footprint: x/out double-buffered, weight+bias resident.
    vmem_bytes = (2 * tm * H * xb + 2 * tm * c_pad * ob
                  + 2 * (H * c_pad * wb + c_pad * wb) + (1 << 20))
    cp_kwargs = dict(dimension_semantics=("parallel",))
    if vmem_bytes > (16 << 20):  # only raise past the smallest (v5e) default scoped limit
        cp_kwargs["vmem_limit_bytes"] = int(min(vmem_bytes, 100 << 20))

    out = pl.pallas_call(
        _linear_kernel,
        out_shape=jax.ShapeDtypeStruct((rows_pad, c_pad), out_dtype),
        grid_spec=pltpu.PrefetchScalarGridSpec(
            num_scalar_prefetch=0,
            grid=(rows_pad // tm,),
            in_specs=[
                pl.BlockSpec((tm, H), lambda i: (i, 0)),      # stream row tiles of x
                pl.BlockSpec((H, c_pad), lambda i: (0, 0)),   # weight resident in VMEM
                pl.BlockSpec((1, c_pad), lambda i: (0, 0)),   # bias resident in VMEM
            ],
            out_specs=pl.BlockSpec((tm, c_pad), lambda i: (i, 0)),
        ),
        compiler_params=pltpu.CompilerParams(**cp_kwargs),
        cost_estimate=cost,
    )(x2d, w_pad, b_pad)

    return out[:rows]


def pooler_start_logits(hidden_states, weight, bias, p_mask=None, *,
                        block_rows=DEFAULT_BLOCK_ROWS, force_pallas=False):
    """hidden_states: [B, S, H]; weight: [C, H] (PyTorch layout); bias: [C]."""
    del p_mask  # unused, matching the reference PyTorch forward
    B, S, H = hidden_states.shape
    C = weight.shape[0]
    rows = B * S
    x2d = hidden_states.reshape(rows, H)

    if rows < MIN_ROWS_FOR_PALLAS and not force_pallas:
        # Tiny problems: plain dot so XLA can fuse; kernel launch overhead dominates here.
        out = x2d @ weight.T + bias
        return out.astype(hidden_states.dtype).reshape(B, S, C)

    w_pad, b_pad, _ = prepare_pooler_params(weight, bias)
    out2d = _pallas_linear(x2d, w_pad, b_pad, hidden_states.dtype, block_rows)
    return out2d[:, :C].reshape(B, S, C)


if __name__ == "__main__":
    key = jax.random.PRNGKey(0)
    k_x, k_w, k_b, k_x2 = jax.random.split(key, 4)

    # --- Small demo shapes consistent with the module: batch=2, seq=8, hidden=32, classes=4 ---
    B, S, H, C = 2, 8, 32, 4
    hidden_states = jax.random.normal(k_x, (B, S, H), dtype=jnp.float32)
    weight = jax.random.normal(k_w, (C, H), dtype=jnp.float32) * 0.02  # PyTorch layout [C, H]
    bias = jax.random.normal(k_b, (C,), dtype=jnp.float32) * 0.02

    out = pooler_start_logits(hidden_states, weight, bias, force_pallas=True)
    out = jax.block_until_ready(out)
    ref = hidden_states @ weight.T + bias
    assert out.shape == (B, S, C)
    assert jnp.allclose(out, ref, atol=1e-4, rtol=1e-4)

    # --- Larger test that exercises the tiled (multi-step) path: 1024 rows, TM=512, grid=2 ---
    B2, S2, H2 = 4, 256, 256
    hs2 = jax.random.normal(k_x2, (B2, S2, H2), dtype=jnp.float32)
    w2 = jax.random.normal(k_w, (C, H2), dtype=jnp.float32) * 0.02
    b2 = jax.random.normal(k_b, (C,), dtype=jnp.float32) * 0.02

    out2 = pooler_start_logits(hs2, w2, b2)
    out2 = jax.block_until_ready(out2)
    ref2 = hs2 @ w2.T + b2
    assert out2.shape == (B2, S2, C)
    assert jnp.allclose(out2, ref2, atol=1e-2, rtol=1e-2)

    print("KERNEL_OK")
</pallas_src>

<mosaic_0001>
module attributes {stable_mosaic.version = 11 : i64} {
  func.func @_linear_kernel(%arg0: i32, %arg1: memref<16x32xf32, #tpu.memory_space<vmem>>, %arg2: memref<32x128xf32, #tpu.memory_space<vmem>>, %arg3: memref<1x128xf32, #tpu.memory_space<vmem>>, %arg4: memref<16x128xf32, #tpu.memory_space<vmem>>) attributes {dimension_semantics = [#tpu.dimension_semantics<parallel>], iteration_bounds = array<i64: 1>, scalar_prefetch = 0 : i64, scratch_operands = 0 : i64, tpu.core_type = #tpu.core_type<tc>, window_params = [{transform_indices = @transform_0, window_bounds = array<i64: 16, 32>}, {pipeline_mode = #tpu.pipeline_mode<synchronous>, transform_indices = @transform_1, window_bounds = array<i64: 32, 128>}, {pipeline_mode = #tpu.pipeline_mode<synchronous>, transform_indices = @transform_2, window_bounds = array<i64: 1, 128>}, {transform_indices = @transform_3, window_bounds = array<i64: 16, 128>}]} {
    %c0 = arith.constant 0 : index
    %c0_0 = arith.constant 0 : index
    %0 = vector.load %arg1[%c0, %c0_0] : memref<16x32xf32, #tpu.memory_space<vmem>>, vector<16x32xf32>
    %c0_1 = arith.constant 0 : index
    %c0_2 = arith.constant 0 : index
    %1 = vector.load %arg2[%c0_1, %c0_2] : memref<32x128xf32, #tpu.memory_space<vmem>>, vector<32x128xf32>
    %cst = arith.constant dense<0.000000e+00> : vector<16x128xf32>
    %2 = tpu.matmul %0, %1, %cst {dimension_numbers = #tpu.dot_dimension_numbers<[1], [0], [0], [1], [0, 0, 1, 1], [], []>} : vector<16x32xf32>, vector<32x128xf32>, vector<16x128xf32> -> vector<16x128xf32>
    %c0_3 = arith.constant 0 : index
    %c0_4 = arith.constant 0 : index
    %3 = vector.load %arg3[%c0_3, %c0_4] : memref<1x128xf32, #tpu.memory_space<vmem>>, vector<1x128xf32>
    %4 = vector.broadcast %3 : vector<1x128xf32> to vector<16x128xf32>
    %5 = arith.addf %2, %4 : vector<16x128xf32>
    %c0_5 = arith.constant 0 : index
    %c0_6 = arith.constant 0 : index
    %6 = vector.load %arg4[%c0_5, %c0_6] : memref<16x128xf32, #tpu.memory_space<vmem>>, vector<16x128xf32>
    tpu.vector_store %arg4[%c0_5, %c0_6], %5 {strides = array<i32>} : memref<16x128xf32, #tpu.memory_space<vmem>>, vector<16x128xf32>,
    return
  }
  func.func @transform_0(%arg0: i32) -> (i32, i32) {
    %c0_i32 = arith.constant 0 : i32
    %c0_i32_0 = arith.constant 0 : i32
    return %arg0, %c0_i32 : i32, i32
  }
  func.func @transform_1(%arg0: i32) -> (i32, i32) {
    %c0_i32 = arith.constant 0 : i32
    %c0_i32_0 = arith.constant 0 : i32
    %c0_i32_1 = arith.constant 0 : i32
    return %c0_i32, %c0_i32_0 : i32, i32
  }
  func.func @transform_2(%arg0: i32) -> (i32, i32) {
    %c0_i32 = arith.constant 0 : i32
    %c0_i32_0 = arith.constant 0 : i32
    %c0_i32_1 = arith.constant 0 : i32
    return %c0_i32, %c0_i32_0 : i32, i32
  }
  func.func @transform_3(%arg0: i32) -> (i32, i32) {
    %c0_i32 = arith.constant 0 : i32
    %c0_i32_0 = arith.constant 0 : i32
    return %arg0, %c0_i32 : i32, i32
  }
}

</mosaic_0001>

<llo_original>
// kernel: tpu_custom_call.1
$region0: #{tpu_custom_call.1}
  #allocation0 [shape = 'u32[]', space=smem, size = 0x4, offset = 0x4, fixed_abs, tag = 'smem constant byte address 0x4 - core index']
  #allocation1 [shape = 'u32[144,128]{1,0:T(1,128)}', space=vmem, size = 0x12000, scoped, tag = 'internal scratch']
  %s0 = inlined_call_operand.hbm [shape: f32[16,32], index: 0, kind: input, shape index: {}]
  %s1 = inlined_call_operand.hbm [shape: f32[32,128], index: 1, kind: input, shape index: {}]
  %s2 = inlined_call_operand.vmem [shape: f32[1,128], index: 2, kind: input, shape index: {}]
  %s3 = inlined_call_operand.hbm [shape: f32[16,128], index: 3, kind: output, shape index: {}]
  %s4 = sld [smem:[#allocation0]]
  $region30: #{tpu_custom_call.1} parent=0
    _
  %s6 = ssub.s32 1, %s4
  %s7 = scalar_select 0, %s6, %s4
  $region1: #{tpu_custom_call.1} parent=0
    #allocation2 [shape = 'u8[8192]{0}', space=vmem, size = 0x2000, scoped, tag = 'input window, operand 0, single buffered']
    #allocation3 [shape = 's32[1]{0}', space=sflag, size = 0x4, scoped, tag = 'scoped memory for tpu_custom_call.1']
    #allocation4 [shape = 's32[1]{0}', space=sflag, size = 0x4, scoped, tag = 'scoped memory for tpu_custom_call.1']
    #allocation5 [shape = 'u8[16384]{0}', space=vmem, size = 0x4000, scoped, tag = 'input window, operand 1, single buffered']
    #allocation6 [shape = 's32[1]{0}', space=sflag, size = 0x4, scoped, tag = 'scoped memory for tpu_custom_call.1']
    #allocation7 [shape = 'u8[8192]{0}', space=vmem, size = 0x2000, scoped, tag = 'output window, operand 0, single buffered']
    %8 = vsyncpa [#allocation3], 0
    %9 = vsyncpa [#allocation6], 0
    %10 = vsyncpa [#allocation4], 0
    // Predicated region
    $region2: #{tpu_custom_call.1} parent=1 // pred_check
      _
    $region3: #{tpu_custom_call.1} parent=1 // pred_check_branch
      %12 = sbr.rel (0) target = $region5
    $region4: #{tpu_custom_call.1} parent=1 // pred_region
      %s14 = ssub.s32 256, 256
      %15 = vsyncadd [#allocation3], %s14
      %s16 = sshll.u32 [#allocation2], 4
      %s17 = int_to_ptr.vmem [resolvable:$true] %s16
      %22 = dma.hbm_to_vmem [thread:$0]  %s0, 256, %s17, [#allocation3], 128, 128, 8
    $region5: #{tpu_custom_call.1} parent=1 // pred_fallthru
      _
    // Predicated region
    $region6: #{tpu_custom_call.1} parent=1 // pred_check
      _
    $region7: #{tpu_custom_call.1} parent=1 // pred_check_branch
      %24 = sbr.rel (0) target = $region9
    $region8: #{tpu_custom_call.1} parent=1 // pred_region
      %s26 = ssub.s32 512, 512
      %27 = vsyncadd [#allocation6], %s26
      %s28 = sshll.u32 [#allocation5], 4
      %s29 = int_to_ptr.vmem [resolvable:$true] %s28
      %34 = dma.hbm_to_vmem [thread:$0]  %s1, 512, %s29, [#allocation6], 128, 128, 8
    $region9: #{tpu_custom_call.1} parent=1 // pred_fallthru
      _
    // Predicated region
    $region10: #{tpu_custom_call.1} parent=1 // pred_check
      _
    $region11: #{tpu_custom_call.1} parent=1 // pred_check_branch
      %36 = sbr.rel (0) target = $region13
    $region12: #{tpu_custom_call.1} parent=1 // pred_region
      _
    $region13: #{tpu_custom_call.1} parent=1 // pred_fallthru
      _
    // Predicated region
    $region14: #{tpu_custom_call.1} parent=1 // pred_check
      _
    $region15: #{tpu_custom_call.1} parent=1 // pred_check_branch
      %38 = sbr.rel (0) target = $region17
    $region16: #{tpu_custom_call.1} parent=1 // pred_region
      %39 = dma.done [#allocation3], 256
    $region17: #{tpu_custom_call.1} parent=1 // pred_fallthru
      _
    // Predicated region
    $region18: #{tpu_custom_call.1} parent=1 // pred_check
      _
    $region19: #{tpu_custom_call.1} parent=1 // pred_check_branch
      %41 = sbr.rel (0) target = $region21
    $region20: #{tpu_custom_call.1} parent=1 // pred_region
      %42 = dma.done [#allocation6], 512
    $region21: #{tpu_custom_call.1} parent=1 // pred_fallthru
      _
    %v43 = vld [vmem:[#allocation2] sm:$0xff]
    %v44 = vld [vmem:[#allocation2 + $0x8] sm:$0xff]
    %v45 = vld [vmem:[#allocation5] sm:$0xff]
    %v46 = vld [vmem:[#allocation5 + $0x8] sm:$0xff]
    %v47 = vld [vmem:[#allocation5 + $0x10] sm:$0xff]
    %v48 = vld [vmem:[#allocation5 + $0x18] sm:$0xff]
    %v49 = vld [vmem:[%s2] sm:$0x1]
    %v51 = vlaneseq
    %v52 = vshrl.u32 %v51, 7
    %v53 = vsub.s32 0, %v52
    %v54 = vrot.slane %v49, %v53
    %vm56 = vcmask 261120
    %v58 = vsel %vm56, %v43, 0
    %v61 = vsel %vm56, %v44, 0
    %63 = vmatprep.subr.mxu0 0.0
    %64 = vmatpush1.msra.mxu0 0.0
    %65 = vmatprep.subr.mxu0 0.0
    %66 = vmatpush1.msra.mxu0 0.0
    %67 = vmatprep.subr.mxu0 0.0
    %68 = vmatpush1.msra.mxu0 0.0
    %69 = vmatprep.subr.mxu0 0.0
    %70 = vmatpush1.msra.mxu0 0.0
    %71 = vmatprep.subr.mxu0 0.0
    %72 = vmatpush1.msra.mxu0 0.0
    %73 = vmatprep.subr.mxu0 0.0
    %74 = vmatpush1.msra.mxu0 0.0
    %75 = vmatprep.subr.mxu0 0.0
    %76 = vmatpush1.msra.mxu0 0.0
    %77 = vmatprep.subr.mxu0 0.0
    %78 = vmatpush1.msra.mxu0 0.0
    %79 = vmatprep.subr.mxu0 0.0
    %80 = vmatpush1.msra.mxu0 0.0
    %81 = vmatprep.subr.mxu0 0.0
    %82 = vmatpush1.msra.mxu0 0.0
    %83 = vmatprep.subr.mxu0 0.0
    %84 = vmatpush1.msra.mxu0 0.0
    %85 = vmatprep.subr.mxu0 0.0
    %86 = vmatpush1.msra.mxu0 0.0
    %87 = vmatprep.subr.mxu0 0.0
    %88 = vmatpush1.msra.mxu0 %v48
    %89 = vmatprep.subr.mxu0 0.0
    %90 = vmatpush1.msra.mxu0 %v47
    %91 = vmatprep.subr.mxu0 0.0
    %92 = vmatpush1.msra.mxu0 %v46
    %93 = vmatprep.subr.mxu0 0.0
    %94 = vmatpush1.msra.mxu0 %v45
    %95 = vmatprep.subr.mxu0 0.0
    %96 = vmatpush2.msra.mxu0 0.0
    %97 = vmatprep.subr.mxu0 0.0
    %98 = vmatpush2.msra.mxu0 0.0
    %99 = vmatprep.subr.mxu0 0.0
    %100 = vmatpush2.msra.mxu0 0.0
    %101 = vmatprep.subr.mxu0 0.0
    %102 = vmatpush2.msra.mxu0 0.0
    %103 = vmatprep.subr.mxu0 0.0
    %104 = vmatpush2.msra.mxu0 0.0
    %105 = vmatprep.subr.mxu0 0.0
    %106 = vmatpush2.msra.mxu0 0.0
    %107 = vmatprep.subr.mxu0 0.0
    %108 = vmatpush2.msra.mxu0 0.0
    %109 = vmatprep.subr.mxu0 0.0
    %110 = vmatpush2.msra.mxu0 0.0
    %111 = vmatprep.subr.mxu0 0.0
    %112 = vmatpush2.msra.mxu0 0.0
    %113 = vmatprep.subr.mxu0 0.0
    %114 = vmatpush2.msra.mxu0 0.0
    %115 = vmatprep.subr.mxu0 0.0
    %116 = vmatpush2.msra.mxu0 0.0
    %117 = vmatprep.subr.mxu0 0.0
    %118 = vmatpush2.msra.mxu0 0.0
    %119 = vmatprep.subr.mxu0 0.0
    %120 = vmatpush2.msra.mxu0 0.0
    %121 = vmatprep.subr.mxu0 0.0
    %122 = vmatpush2.msra.mxu0 0.0
    %123 = vmatprep.subr.mxu0 0.0
    %124 = vmatpush2.msra.mxu0 0.0
    %125 = vmatprep.subr.mxu0 0.0
    %126 = vmatpush2.msra.mxu0 0.0
    %127 = vmatprep.mubr.f32.mxu0 0.0
    %128 = vmatmul.mubr.f32.gmra.mxu0 %v58
    %v129 = vpop.f32.mrf.mxu0
    %v130 = vadd.f32 %v54, %v129
    %v131 = vpop.f32.mrf.mxu0
    %132 = vmatprep.mubr.f32.mxu0 0.0
    %133 = vmatmul.mubr.f32.gmra.mxu0 %v61
    %v134 = vpop.f32.mrf.mxu0
    %v135 = vadd.f32 %v54, %v134
    %v136 = vpop.f32.mrf.mxu0
    %137 = vdwg.mxu0
    %138 = vst [vmem:[#allocation7] sm:$0xff] %v130
    %139 = vst [vmem:[#allocation7 + $0x8] sm:$0xff] %v135
    // Predicated region
    $region22: #{tpu_custom_call.1} parent=1 // pred_check
      _
    $region23: #{tpu_custom_call.1} parent=1 // pred_check_branch
      %141 = sbr.rel (0) target = $region25
    $region24: #{tpu_custom_call.1} parent=1 // pred_region
      %s143 = ssub.s32 256, 256
      %144 = vsyncadd [#allocation4], %s143
      %s145 = sshll.u32 [#allocation7], 4
      %s146 = int_to_ptr.vmem [resolvable:$true] %s145
      %151 = dma.vmem_to_hbm [thread:$0]  %s146, 256, %s3, [#allocation4], 128, 128, 8
    $region25: #{tpu_custom_call.1} parent=1 // pred_fallthru
      _
    // Predicated region
    $region26: #{tpu_custom_call.1} parent=1 // pred_check
      _
    $region27: #{tpu_custom_call.1} parent=1 // pred_check_branch
      %153 = sbr.rel (0) target = $region29
    $region28: #{tpu_custom_call.1} parent=1 // pred_region
      %154 = dma.done [#allocation4], 256
    $region29: #{tpu_custom_call.1} parent=1 // pred_fallthru
      _
    %155 = vsyncpa [#allocation3], 1
    %156 = vsyncpa [#allocation6], 1
    %157 = vsyncpa [#allocation4], 1

</llo_original>
